<compile_context>
chip_gen: v5e
topology: v5e:2x2
jax: 0.10.0
libtpu: 0.0.40
codegen_flags: <defaults>
</compile_context>

<pallas_src>
import jax
import jax.numpy as jnp
from jax import lax
from jax.experimental import pallas as pl
from jax.experimental.pallas import tpu as pltpu

TEMPERATURE = 0.07
LAMBDA_CL = 0.1
_NEG_BIG = -1e30  # "-inf" stand-in: exp underflows cleanly, subtractions stay finite


def session_contrastive_loss(seq_repr, augmented_repr, scores, targets, *,
                             tv=None, strip_rows=256):
    """Returns (total_loss, ce_loss, cl_loss) as f32 scalars."""
    B, H = seq_repr.shape
    V = scores.shape[1]
    N = 2 * B
    s_bytes = jnp.dtype(scores.dtype).itemsize
    f_bytes = jnp.dtype(seq_repr.dtype).itemsize

    # ---- byte-budgeted, lane-dense V tile (scores streamed in native dtype) ----
    if tv is None:
        budget = 2 << 20                                    # ~2 MiB per (B, tv) tile
        tv = max(128, (budget // (s_bytes * B)) // 128 * 128)
    if tv >= V:
        tv = V                                              # single full-width tile
    else:
        tv = max(128, (tv // 128) * 128)
    nk = pl.cdiv(V, tv)
    TV = tv
    SR = min(strip_rows, N)                                 # SupCon row-strip size
    inv_t = 1.0 / TEMPERATURE

    targets2d = targets.astype(jnp.int32).reshape(B, 1)

    def kernel(seq_ref, aug_ref, tgt_ref, scores_ref, out_ref,
               m_sc, l_sc, t_sc, cl_sc, fn_sc):
        k = pl.program_id(0)

        # ---- step 0: init CE accumulators + the whole SupCon term (V-independent;
        # doing it here hides it under the DMA of scores tiles 1..nk-1) ----
        @pl.when(k == 0)
        def _():
            out_ref[...] = jnp.zeros_like(out_ref)
            m_sc[...] = jnp.full_like(m_sc, _NEG_BIG)
            l_sc[...] = jnp.zeros_like(l_sc)
            t_sc[...] = jnp.zeros_like(t_sc)

            seq = seq_ref[...].astype(jnp.float32)
            aug = aug_ref[...].astype(jnp.float32)

            def l2n(x):  # F.normalize(dim=1), eps=1e-12; rsqrt -> EUP slot
                ss = jnp.sum(x * x, axis=1, keepdims=True)
                return x * lax.rsqrt(jnp.maximum(ss, 1e-24))

            sn = l2n(seq)
            an = l2n(aug)
            # build the (N,H) normalized stack directly in scratch (no concat copy)
            fn_sc[0:B, :] = sn
            fn_sc[B:N, :] = an

            # exactly ONE positive per row -> its logit is the row-wise dot of the
            # two normalized halves (no exp/log on the numerator path)
            sum_pos = 2.0 * inv_t * jnp.sum(sn * an, keepdims=True)        # (1,1)

            # strip-tiled row-logsumexp over the N x N similarity; the full (N,N)
            # sim / exp(sim) is never materialized.
            fn_all = fn_sc[...]
            sum_lse = jnp.zeros((1, 1), jnp.float32)
            for s0 in range(0, N, SR):
                sl = min(SR, N - s0)
                strip = fn_sc[s0:s0 + sl, :]
                sim = lax.dot_general(strip, fn_all, (((1,), (1,)), ((), ())),
                                      preferred_element_type=jnp.float32) * inv_t
                rr = s0 + lax.broadcasted_iota(jnp.int32, (sl, N), 0)
                cc = lax.broadcasted_iota(jnp.int32, (sl, N), 1)
                sim = jnp.where(rr == cc, _NEG_BIG, sim)                   # mask self
                rmax = jnp.max(sim, axis=1, keepdims=True)
                lse = jnp.log(jnp.sum(jnp.exp(sim - rmax), axis=1,
                                      keepdims=True)) + rmax               # (sl,1)
                sum_lse = sum_lse + jnp.sum(lse, keepdims=True)
            cl_sc[...] = (sum_lse - sum_pos) * (1.0 / N)

        # ---- streamed online-logsumexp CE over this (B, TV) tile ----
        x = scores_ref[...].astype(jnp.float32)           # per-tile upcast in VMEM
        col = k * TV + lax.broadcasted_iota(jnp.int32, (B, TV), 1)
        if V % TV != 0:
            # ragged last tile: mask in-kernel instead of a wrapper-side HBM pad
            x = jnp.where(col < V, x, _NEG_BIG)

        tgt = tgt_ref[...]                                 # (B,1) int32
        m_old = m_sc[...]
        m_new = jnp.maximum(m_old, jnp.max(x, axis=1, keepdims=True))
        alpha = jnp.exp(m_old - m_new)
        l_sc[...] = alpha * l_sc[...] + jnp.sum(jnp.exp(x - m_new),
                                                axis=1, keepdims=True)
        m_sc[...] = m_new
        # target logit: exactly one hit across all tiles -> select, not mask-multiply
        t_sc[...] = t_sc[...] + jnp.sum(jnp.where(col == tgt, x, 0.0),
                                        axis=1, keepdims=True)

        # ---- finalize: CE mean + pack (total, ce, cl) into one lane-dense row ----
        @pl.when(k == nk - 1)
        def _():
            lse = jnp.log(l_sc[...]) + m_sc[...]                            # (B,1)
            ce = jnp.sum(lse - t_sc[...], axis=0, keepdims=True) * (1.0 / B)
            cl = cl_sc[...]
            total = ce + LAMBDA_CL * cl
            lane = lax.broadcasted_iota(jnp.int32, (1, 128), 1)
            out_ref[...] = jnp.where(lane == 0, total,
                           jnp.where(lane == 1, ce,
                           jnp.where(lane == 2, cl, 0.0)))

    # VMEM budget: double-buffered scores stream + residents + scratch, 2x headroom
    est = (2 * B * TV * s_bytes + 2 * (2 * B * H * f_bytes + B * 4)
           + N * H * 4 + 3 * B * 4 + 4 + 128 * 4)
    vmem_limit = int(min(64 << 20, max(32 << 20, 2 * est)))

    cost = pl.CostEstimate(
        flops=int(2 * N * N * H + 8 * B * V),
        transcendentals=int(B * V + N * N + 4 * N + 2 * B),
        bytes_accessed=int(B * V * s_bytes + 2 * B * H * f_bytes + B * 4 + 512))

    out = pl.pallas_call(
        kernel,
        out_shape=jax.ShapeDtypeStruct((1, 128), jnp.float32),
        grid_spec=pltpu.PrefetchScalarGridSpec(
            num_scalar_prefetch=0,
            grid=(nk,),
            in_specs=[
                pl.BlockSpec((B, H), lambda k: (0, 0)),    # seq_repr (resident)
                pl.BlockSpec((B, H), lambda k: (0, 0)),    # augmented_repr (resident)
                pl.BlockSpec((B, 1), lambda k: (0, 0)),    # targets (resident)
                pl.BlockSpec((B, TV), lambda k: (0, k)),   # scores (streamed over V)
            ],
            out_specs=pl.BlockSpec((1, 128), lambda k: (0, 0)),
            scratch_shapes=[pltpu.VMEM((B, 1), jnp.float32),   # running max
                            pltpu.VMEM((B, 1), jnp.float32),   # running exp-sum
                            pltpu.VMEM((B, 1), jnp.float32),   # target logit
                            pltpu.VMEM((1, 1), jnp.float32),   # SupCon loss stash
                            pltpu.VMEM((N, H), jnp.float32)],  # normalized stack
        ),
        compiler_params=pltpu.CompilerParams(
            dimension_semantics=("arbitrary",),
            vmem_limit_bytes=vmem_limit),
        cost_estimate=cost,
    )(seq_repr, augmented_repr, targets2d, scores)
    return out[0, 0], out[0, 1], out[0, 2]


def _reference(seq_repr, augmented_repr, scores, targets):
    """Pure-JAX reference reproducing the PyTorch semantics (interleaved order)."""
    B, H = seq_repr.shape
    # CE
    lse = jax.nn.logsumexp(scores.astype(jnp.float32), axis=1)
    ce = jnp.mean(lse - scores[jnp.arange(B), targets])
    # SupCon
    feats = jnp.concatenate(
        [seq_repr[:, None, :], augmented_repr[:, None, :]], axis=1
    ).reshape(2 * B, H).astype(jnp.float32)
    feats = feats / jnp.maximum(
        jnp.linalg.norm(feats, axis=1, keepdims=True), 1e-12)
    sim = feats @ feats.T / TEMPERATURE
    N = 2 * B
    eye = jnp.eye(N, dtype=bool)
    labels = jnp.repeat(jnp.arange(B), 2)
    pos = (labels[:, None] == labels[None, :]) & ~eye
    exp_logits = jnp.where(eye, 0.0, jnp.exp(sim))
    pos_exp_sum = jnp.sum(exp_logits * pos, axis=1)
    log_prob = jnp.log(pos_exp_sum) - jnp.log(jnp.sum(exp_logits, axis=1))
    cl = -jnp.mean(log_prob)
    return ce + LAMBDA_CL * cl, ce, cl


if __name__ == "__main__":
    B, H, V = 8, 32, 512  # batch, hidden_dim, num_items
    key = jax.random.PRNGKey(0)
    k1, k2, k3, k4 = jax.random.split(key, 4)
    seq_repr = jax.random.normal(k1, (B, H), dtype=jnp.float32)
    augmented_repr = seq_repr + 0.1 * jax.random.normal(k2, (B, H), dtype=jnp.float32)
    scores = jax.random.normal(k3, (B, V), dtype=jnp.float32)
    targets = jax.random.randint(k4, (B,), 0, V, dtype=jnp.int32)

    # tv=128 -> 4 grid steps, exercising the streamed online-logsumexp CE path
    total, ce, cl = jax.block_until_ready(
        session_contrastive_loss(seq_repr, augmented_repr, scores, targets, tv=128))
    ref_total, ref_ce, ref_cl = _reference(seq_repr, augmented_repr, scores, targets)
    assert jnp.allclose(total, ref_total, rtol=1e-4, atol=1e-4), (total, ref_total)
    assert jnp.allclose(ce, ref_ce, rtol=1e-4, atol=1e-4), (ce, ref_ce)
    assert jnp.allclose(cl, ref_cl, rtol=1e-4, atol=1e-4), (cl, ref_cl)

    # ragged V (500 % 128 != 0) -> exercises the in-kernel tail mask (no HBM pad)
    V2 = 500
    scores2 = scores[:, :V2]
    targets2 = jnp.minimum(targets, V2 - 1)
    total2, ce2, cl2 = jax.block_until_ready(
        session_contrastive_loss(seq_repr, augmented_repr, scores2, targets2, tv=128))
    r_total2, r_ce2, r_cl2 = _reference(seq_repr, augmented_repr, scores2, targets2)
    assert jnp.allclose(total2, r_total2, rtol=1e-4, atol=1e-4), (total2, r_total2)
    assert jnp.allclose(ce2, r_ce2, rtol=1e-4, atol=1e-4), (ce2, r_ce2)
    assert jnp.allclose(cl2, r_cl2, rtol=1e-4, atol=1e-4), (cl2, r_cl2)

    print("KERNEL_OK")
</pallas_src>

<mosaic_0001>
module attributes {stable_mosaic.version = 11 : i64} {
  func.func @kernel(%arg0: i32, %arg1: memref<8x32xf32, #tpu.memory_space<vmem>>, %arg2: memref<8x32xf32, #tpu.memory_space<vmem>>, %arg3: memref<8x1xi32, #tpu.memory_space<vmem>>, %arg4: memref<8x128xf32, #tpu.memory_space<vmem>>, %arg5: memref<1x128xf32, #tpu.memory_space<vmem>>, %arg6: memref<8x1xf32, #tpu.memory_space<vmem>>, %arg7: memref<8x1xf32, #tpu.memory_space<vmem>>, %arg8: memref<8x1xf32, #tpu.memory_space<vmem>>, %arg9: memref<1x1xf32, #tpu.memory_space<vmem>>, %arg10: memref<16x32xf32, #tpu.memory_space<vmem>>) attributes {dimension_semantics = [#tpu.dimension_semantics<arbitrary>], iteration_bounds = array<i64: 4>, scalar_prefetch = 0 : i64, scratch_operands = 5 : i64, tpu.core_type = #tpu.core_type<tc>, window_params = [{pipeline_mode = #tpu.pipeline_mode<synchronous>, transform_indices = @transform_0, window_bounds = array<i64: 8, 32>}, {pipeline_mode = #tpu.pipeline_mode<synchronous>, transform_indices = @transform_1, window_bounds = array<i64: 8, 32>}, {pipeline_mode = #tpu.pipeline_mode<synchronous>, transform_indices = @transform_2, window_bounds = array<i64: 8, 1>}, {transform_indices = @transform_3, window_bounds = array<i64: 8, 128>}, {pipeline_mode = #tpu.pipeline_mode<synchronous>, transform_indices = @transform_4, window_bounds = array<i64: 1, 128>}]} {
    %c0_i32 = arith.constant 0 : i32
    %0 = arith.cmpi eq, %arg0, %c0_i32 : i32
    %1 = arith.extui %0 : i1 to i32
    %c0_i32_0 = arith.constant 0 : i32
    %2 = arith.cmpi ne, %1, %c0_i32_0 : i32
    scf.if %2 {
      %cst_20 = arith.constant 0.000000e+00 : f32
      %37 = vector.broadcast %cst_20 : f32 to vector<1x128xf32>
      %c0_21 = arith.constant 0 : index
      %c0_22 = arith.constant 0 : index
      %38 = vector.load %arg5[%c0_21, %c0_22] : memref<1x128xf32, #tpu.memory_space<vmem>>, vector<1x128xf32>
      tpu.vector_store %arg5[%c0_21, %c0_22], %37 {strides = array<i32>} : memref<1x128xf32, #tpu.memory_space<vmem>>, vector<1x128xf32>,
      %cst_23 = arith.constant -1.000000e+30 : f32
      %39 = vector.broadcast %cst_23 : f32 to vector<8x1xf32>
      %c0_24 = arith.constant 0 : index
      %c0_25 = arith.constant 0 : index
      %40 = vector.load %arg6[%c0_24, %c0_25] : memref<8x1xf32, #tpu.memory_space<vmem>>, vector<8x1xf32>
      tpu.vector_store %arg6[%c0_24, %c0_25], %39 {strides = array<i32>} : memref<8x1xf32, #tpu.memory_space<vmem>>, vector<8x1xf32>,
      %cst_26 = arith.constant 0.000000e+00 : f32
      %41 = vector.broadcast %cst_26 : f32 to vector<8x1xf32>
      %c0_27 = arith.constant 0 : index
      %c0_28 = arith.constant 0 : index
      %42 = vector.load %arg7[%c0_27, %c0_28] : memref<8x1xf32, #tpu.memory_space<vmem>>, vector<8x1xf32>
      tpu.vector_store %arg7[%c0_27, %c0_28], %41 {strides = array<i32>} : memref<8x1xf32, #tpu.memory_space<vmem>>, vector<8x1xf32>,
      %cst_29 = arith.constant 0.000000e+00 : f32
      %43 = vector.broadcast %cst_29 : f32 to vector<8x1xf32>
      %c0_30 = arith.constant 0 : index
      %c0_31 = arith.constant 0 : index
      %44 = vector.load %arg8[%c0_30, %c0_31] : memref<8x1xf32, #tpu.memory_space<vmem>>, vector<8x1xf32>
      tpu.vector_store %arg8[%c0_30, %c0_31], %43 {strides = array<i32>} : memref<8x1xf32, #tpu.memory_space<vmem>>, vector<8x1xf32>,
      %c0_32 = arith.constant 0 : index
      %c0_33 = arith.constant 0 : index
      %45 = vector.load %arg1[%c0_32, %c0_33] : memref<8x32xf32, #tpu.memory_space<vmem>>, vector<8x32xf32>
      %c0_34 = arith.constant 0 : index
      %c0_35 = arith.constant 0 : index
      %46 = vector.load %arg2[%c0_34, %c0_35] : memref<8x32xf32, #tpu.memory_space<vmem>>, vector<8x32xf32>
      %47 = arith.mulf %45, %45 : vector<8x32xf32>
      %cst_36 = arith.constant dense<0.000000e+00> : vector<8xf32>
      %48 = vector.multi_reduction <add>, %47, %cst_36 [1] : vector<8x32xf32> to vector<8xf32>
      %49 = vector.shape_cast %48 : vector<8xf32> to vector<8x1xf32>
      %cst_37 = arith.constant 1.000000e-24 : f32
      %50 = vector.broadcast %cst_37 : f32 to vector<8x1xf32>
      %51 = arith.maximumf %49, %50 : vector<8x1xf32>
      %52 = math.rsqrt %51 : vector<8x1xf32>
      %53 = vector.broadcast %52 : vector<8x1xf32> to vector<8x32xf32>
      %54 = arith.mulf %45, %53 : vector<8x32xf32>
      %55 = arith.mulf %46, %46 : vector<8x32xf32>
      %cst_38 = arith.constant dense<0.000000e+00> : vector<8xf32>
      %56 = vector.multi_reduction <add>, %55, %cst_38 [1] : vector<8x32xf32> to vector<8xf32>
      %57 = vector.shape_cast %56 : vector<8xf32> to vector<8x1xf32>
      %cst_39 = arith.constant 1.000000e-24 : f32
      %58 = vector.broadcast %cst_39 : f32 to vector<8x1xf32>
      %59 = arith.maximumf %57, %58 : vector<8x1xf32>
      %60 = math.rsqrt %59 : vector<8x1xf32>
      %61 = vector.broadcast %60 : vector<8x1xf32> to vector<8x32xf32>
      %62 = arith.mulf %46, %61 : vector<8x32xf32>
      %c0_40 = arith.constant 0 : index
      %c0_41 = arith.constant 0 : index
      %63 = vector.load %arg10[%c0_40, %c0_41] : memref<16x32xf32, #tpu.memory_space<vmem>>, vector<8x32xf32>
      tpu.vector_store %arg10[%c0_40, %c0_41], %54 {strides = array<i32>} : memref<16x32xf32, #tpu.memory_space<vmem>>, vector<8x32xf32>,
      %c8 = arith.constant 8 : index
      %c0_42 = arith.constant 0 : index
      %64 = vector.load %arg10[%c8, %c0_42] : memref<16x32xf32, #tpu.memory_space<vmem>>, vector<8x32xf32>
      tpu.vector_store %arg10[%c8, %c0_42], %62 {strides = array<i32>} : memref<16x32xf32, #tpu.memory_space<vmem>>, vector<8x32xf32>,
      %65 = arith.mulf %54, %62 : vector<8x32xf32>
      %66 = vector.shape_cast %65 : vector<8x32xf32> to vector<1x8x32xf32>
      %cst_43 = arith.constant dense<0.000000e+00> : vector<1xf32>
      %67 = vector.multi_reduction <add>, %66, %cst_43 [1, 2] : vector<1x8x32xf32> to vector<1xf32>
      %68 = vector.shape_cast %67 : vector<1xf32> to vector<1x1x1xf32>
      %69 = vector.extract %68[0, 0, 0] : f32 from vector<1x1x1xf32>
      %70 = vector.broadcast %69 : f32 to vector<1x1xf32>
      %cst_44 = arith.constant 28.5714283 : f32
      %71 = vector.broadcast %cst_44 : f32 to vector<1x1xf32>
      %72 = arith.mulf %71, %70 : vector<1x1xf32>
      %c0_45 = arith.constant 0 : index
      %c0_46 = arith.constant 0 : index
      %73 = vector.load %arg10[%c0_45, %c0_46] : memref<16x32xf32, #tpu.memory_space<vmem>>, vector<16x32xf32>
      %cst_47 = arith.constant 0.000000e+00 : f32
      %74 = vector.broadcast %cst_47 : f32 to vector<1x1xf32>
      %c0_48 = arith.constant 0 : index
      %c0_49 = arith.constant 0 : index
      %75 = vector.load %arg10[%c0_48, %c0_49] : memref<16x32xf32, #tpu.memory_space<vmem>>, vector<16x32xf32>
      %cst_50 = arith.constant dense<0.000000e+00> : vector<16x16xf32>
      %76 = tpu.matmul %75, %73, %cst_50 {dimension_numbers = #tpu.dot_dimension_numbers<[1], [1], [0], [0], [0, 0, 1, 0], [], []>} : vector<16x32xf32>, vector<16x32xf32>, vector<16x16xf32> -> vector<16x16xf32>
      %cst_51 = arith.constant 14.2857141 : f32
      %77 = vector.broadcast %cst_51 : f32 to vector<16x16xf32>
      %78 = arith.mulf %76, %77 : vector<16x16xf32>
      %79 = tpu.iota {dimensions = array<i32: 0>} : vector<16x16xi32>
      %c0_i32_52 = arith.constant 0 : i32
      %80 = vector.broadcast %c0_i32_52 : i32 to vector<16x16xi32>
      %81 = arith.addi %80, %79 : vector<16x16xi32>
      %82 = tpu.iota {dimensions = array<i32: 1>} : vector<16x16xi32>
      %83 = arith.cmpi eq, %81, %82 : vector<16x16xi32>
      %cst_53 = arith.constant -1.000000e+30 : f32
      %84 = vector.broadcast %cst_53 : f32 to vector<16x16xf32>
      %85 = arith.select %83, %84, %78 : vector<16x16xi1>, vector<16x16xf32>
      %cst_54 = arith.constant dense<0xFF800000> : vector<16xf32>
      %86 = vector.multi_reduction <maximumf>, %85, %cst_54 [1] : vector<16x16xf32> to vector<16xf32>
      %87 = vector.shape_cast %86 : vector<16xf32> to vector<16x1xf32>
      %88 = vector.broadcast %87 : vector<16x1xf32> to vector<16x16xf32>
      %89 = arith.subf %85, %88 : vector<16x16xf32>
      %90 = math.exp %89 : vector<16x16xf32>
      %cst_55 = arith.constant dense<0.000000e+00> : vector<16xf32>
      %91 = vector.multi_reduction <add>, %90, %cst_55 [1] : vector<16x16xf32> to vector<16xf32>
      %92 = vector.shape_cast %91 : vector<16xf32> to vector<16x1xf32>
      %93 = math.log %92 : vector<16x1xf32>
      %94 = arith.addf %93, %87 : vector<16x1xf32>
      %95 = vector.shape_cast %94 : vector<16x1xf32> to vector<1x16x1xf32>
      %cst_56 = arith.constant dense<0.000000e+00> : vector<1xf32>
      %96 = vector.multi_reduction <add>, %95, %cst_56 [1, 2] : vector<1x16x1xf32> to vector<1xf32>
      %97 = vector.shape_cast %96 : vector<1xf32> to vector<1x1x1xf32>
      %98 = vector.extract %97[0, 0, 0] : f32 from vector<1x1x1xf32>
      %99 = vector.broadcast %98 : f32 to vector<1x1xf32>
      %100 = arith.addf %74, %99 : vector<1x1xf32>
      %101 = arith.subf %100, %72 : vector<1x1xf32>
      %cst_57 = arith.constant 6.250000e-02 : f32
      %102 = vector.broadcast %cst_57 : f32 to vector<1x1xf32>
      %103 = arith.mulf %101, %102 : vector<1x1xf32>
      %c0_58 = arith.constant 0 : index
      %c0_59 = arith.constant 0 : index
      %104 = vector.load %arg9[%c0_58, %c0_59] : memref<1x1xf32, #tpu.memory_space<vmem>>, vector<1x1xf32>
      tpu.vector_store %arg9[%c0_58, %c0_59], %103 {strides = array<i32>} : memref<1x1xf32, #tpu.memory_space<vmem>>, vector<1x1xf32>,
    } else {
    }
    %c0 = arith.constant 0 : index
    %c0_1 = arith.constant 0 : index
    %3 = vector.load %arg4[%c0, %c0_1] : memref<8x128xf32, #tpu.memory_space<vmem>>, vector<8x128xf32>
    %c128_i32 = arith.constant 128 : i32
    %4 = arith.muli %arg0, %c128_i32 : i32
    %5 = tpu.iota {dimensions = array<i32: 1>} : vector<8x128xi32>
    %6 = vector.broadcast %4 : i32 to vector<8x128xi32>
    %7 = arith.addi %6, %5 : vector<8x128xi32>
    %c0_2 = arith.constant 0 : index
    %c0_3 = arith.constant 0 : index
    %8 = vector.load %arg3[%c0_2, %c0_3] : memref<8x1xi32, #tpu.memory_space<vmem>>, vector<8x1xi32>
    %c0_4 = arith.constant 0 : index
    %c0_5 = arith.constant 0 : index
    %9 = vector.load %arg6[%c0_4, %c0_5] : memref<8x1xf32, #tpu.memory_space<vmem>>, vector<8x1xf32>
    %cst = arith.constant dense<0xFF800000> : vector<8xf32>
    %10 = vector.multi_reduction <maximumf>, %3, %cst [1] : vector<8x128xf32> to vector<8xf32>
    %11 = vector.shape_cast %10 : vector<8xf32> to vector<8x1xf32>
    %12 = arith.maximumf %9, %11 : vector<8x1xf32>
    %13 = arith.subf %9, %12 : vector<8x1xf32>
    %14 = math.exp %13 : vector<8x1xf32>
    %c0_6 = arith.constant 0 : index
    %c0_7 = arith.constant 0 : index
    %15 = vector.load %arg7[%c0_6, %c0_7] : memref<8x1xf32, #tpu.memory_space<vmem>>, vector<8x1xf32>
    %16 = arith.mulf %14, %15 : vector<8x1xf32>
    %17 = vector.broadcast %12 : vector<8x1xf32> to vector<8x128xf32>
    %18 = arith.subf %3, %17 : vector<8x128xf32>
    %19 = math.exp %18 : vector<8x128xf32>
    %cst_8 = arith.constant dense<0.000000e+00> : vector<8xf32>
    %20 = vector.multi_reduction <add>, %19, %cst_8 [1] : vector<8x128xf32> to vector<8xf32>
    %21 = vector.shape_cast %20 : vector<8xf32> to vector<8x1xf32>
    %22 = arith.addf %16, %21 : vector<8x1xf32>
    %c0_9 = arith.constant 0 : index
    %c0_10 = arith.constant 0 : index
    %23 = vector.load %arg7[%c0_9, %c0_10] : memref<8x1xf32, #tpu.memory_space<vmem>>, vector<8x1xf32>
    tpu.vector_store %arg7[%c0_9, %c0_10], %22 {strides = array<i32>} : memref<8x1xf32, #tpu.memory_space<vmem>>, vector<8x1xf32>,
    %c0_11 = arith.constant 0 : index
    %c0_12 = arith.constant 0 : index
    %24 = vector.load %arg6[%c0_11, %c0_12] : memref<8x1xf32, #tpu.memory_space<vmem>>, vector<8x1xf32>
    tpu.vector_store %arg6[%c0_11, %c0_12], %12 {strides = array<i32>} : memref<8x1xf32, #tpu.memory_space<vmem>>, vector<8x1xf32>,
    %c0_13 = arith.constant 0 : index
    %c0_14 = arith.constant 0 : index
    %25 = vector.load %arg8[%c0_13, %c0_14] : memref<8x1xf32, #tpu.memory_space<vmem>>, vector<8x1xf32>
    %26 = vector.broadcast %8 : vector<8x1xi32> to vector<8x128xi32>
    %27 = arith.cmpi eq, %7, %26 : vector<8x128xi32>
    %cst_15 = arith.constant 0.000000e+00 : f32
    %28 = vector.broadcast %cst_15 : f32 to vector<8x128xf32>
    %29 = arith.select %27, %3, %28 : vector<8x128xi1>, vector<8x128xf32>
    %cst_16 = arith.constant dense<0.000000e+00> : vector<8xf32>
    %30 = vector.multi_reduction <add>, %29, %cst_16 [1] : vector<8x128xf32> to vector<8xf32>
    %31 = vector.shape_cast %30 : vector<8xf32> to vector<8x1xf32>
    %32 = arith.addf %25, %31 : vector<8x1xf32>
    %c0_17 = arith.constant 0 : index
    %c0_18 = arith.constant 0 : index
    %33 = vector.load %arg8[%c0_17, %c0_18] : memref<8x1xf32, #tpu.memory_space<vmem>>, vector<8x1xf32>
    tpu.vector_store %arg8[%c0_17, %c0_18], %32 {strides = array<i32>} : memref<8x1xf32, #tpu.memory_space<vmem>>, vector<8x1xf32>,
    %c3_i32 = arith.constant 3 : i32
    %34 = arith.cmpi eq, %arg0, %c3_i32 : i32
    %35 = arith.extui %34 : i1 to i32
    %c0_i32_19 = arith.constant 0 : i32
    %36 = arith.cmpi ne, %35, %c0_i32_19 : i32
    scf.if %36 {
      %c0_20 = arith.constant 0 : index
      %c0_21 = arith.constant 0 : index
      %37 = vector.load %arg7[%c0_20, %c0_21] : memref<8x1xf32, #tpu.memory_space<vmem>>, vector<8x1xf32>
      %38 = math.log %37 : vector<8x1xf32>
      %c0_22 = arith.constant 0 : index
      %c0_23 = arith.constant 0 : index
      %39 = vector.load %arg6[%c0_22, %c0_23] : memref<8x1xf32, #tpu.memory_space<vmem>>, vector<8x1xf32>
      %40 = arith.addf %38, %39 : vector<8x1xf32>
      %c0_24 = arith.constant 0 : index
      %c0_25 = arith.constant 0 : index
      %41 = vector.load %arg8[%c0_24, %c0_25] : memref<8x1xf32, #tpu.memory_space<vmem>>, vector<8x1xf32>
      %42 = arith.subf %40, %41 : vector<8x1xf32>
      %cst_26 = arith.constant dense<0.000000e+00> : vector<1xf32>
      %43 = vector.multi_reduction <add>, %42, %cst_26 [0] : vector<8x1xf32> to vector<1xf32>
      %44 = vector.shape_cast %43 : vector<1xf32> to vector<1x1xf32>
      %cst_27 = arith.constant 1.250000e-01 : f32
      %45 = vector.broadcast %cst_27 : f32 to vector<1x1xf32>
      %46 = arith.mulf %44, %45 : vector<1x1xf32>
      %c0_28 = arith.constant 0 : index
      %c0_29 = arith.constant 0 : index
      %47 = vector.load %arg9[%c0_28, %c0_29] : memref<1x1xf32, #tpu.memory_space<vmem>>, vector<1x1xf32>
      %cst_30 = arith.constant 1.000000e-01 : f32
      %48 = vector.broadcast %cst_30 : f32 to vector<1x1xf32>
      %49 = arith.mulf %48, %47 : vector<1x1xf32>
      %50 = arith.addf %46, %49 : vector<1x1xf32>
      %51 = tpu.iota {dimensions = array<i32: 1>} : vector<1x128xi32>
      %c0_i32_31 = arith.constant 0 : i32
      %52 = vector.broadcast %c0_i32_31 : i32 to vector<1x128xi32>
      %53 = arith.cmpi eq, %51, %52 : vector<1x128xi32>
      %c1_i32 = arith.constant 1 : i32
      %54 = vector.broadcast %c1_i32 : i32 to vector<1x128xi32>
      %55 = arith.cmpi eq, %51, %54 : vector<1x128xi32>
      %c2_i32 = arith.constant 2 : i32
      %56 = vector.broadcast %c2_i32 : i32 to vector<1x128xi32>
      %57 = arith.cmpi eq, %51, %56 : vector<1x128xi32>
      %cst_32 = arith.constant 0.000000e+00 : f32
      %58 = vector.shape_cast %47 : vector<1x1xf32> to vector<1x1xf32>
      %59 = vector.broadcast %58 : vector<1x1xf32> to vector<1x128xf32>
      %60 = vector.broadcast %cst_32 : f32 to vector<1x128xf32>
      %61 = arith.select %57, %59, %60 : vector<1x128xi1>, vector<1x128xf32>
      %62 = vector.shape_cast %46 : vector<1x1xf32> to vector<1x1xf32>
      %63 = vector.broadcast %62 : vector<1x1xf32> to vector<1x128xf32>
      %64 = arith.select %55, %63, %61 : vector<1x128xi1>, vector<1x128xf32>
      %65 = vector.shape_cast %50 : vector<1x1xf32> to vector<1x1xf32>
      %66 = vector.broadcast %65 : vector<1x1xf32> to vector<1x128xf32>
      %67 = arith.select %53, %66, %64 : vector<1x128xi1>, vector<1x128xf32>
      %c0_33 = arith.constant 0 : index
      %c0_34 = arith.constant 0 : index
      %68 = vector.load %arg5[%c0_33, %c0_34] : memref<1x128xf32, #tpu.memory_space<vmem>>, vector<1x128xf32>
      tpu.vector_store %arg5[%c0_33, %c0_34], %67 {strides = array<i32>} : memref<1x128xf32, #tpu.memory_space<vmem>>, vector<1x128xf32>,
    } else {
    }
    return
  }
  func.func @transform_0(%arg0: i32) -> (i32, i32) {
    %c0_i32 = arith.constant 0 : i32
    %c0_i32_0 = arith.constant 0 : i32
    %c0_i32_1 = arith.constant 0 : i32
    return %c0_i32, %c0_i32_0 : i32, i32
  }
  func.func @transform_1(%arg0: i32) -> (i32, i32) {
    %c0_i32 = arith.constant 0 : i32
    %c0_i32_0 = arith.constant 0 : i32
    %c0_i32_1 = arith.constant 0 : i32
    return %c0_i32, %c0_i32_0 : i32, i32
  }
  func.func @transform_2(%arg0: i32) -> (i32, i32) {
    %c0_i32 = arith.constant 0 : i32
    %c0_i32_0 = arith.constant 0 : i32
    %c0_i32_1 = arith.constant 0 : i32
    return %c0_i32, %c0_i32_0 : i32, i32
  }
  func.func @transform_3(%arg0: i32) -> (i32, i32) {
    %c0_i32 = arith.constant 0 : i32
    %c0_i32_0 = arith.constant 0 : i32
    return %c0_i32, %arg0 : i32, i32
  }
  func.func @transform_4(%arg0: i32) -> (i32, i32) {
    %c0_i32 = arith.constant 0 : i32
    %c0_i32_0 = arith.constant 0 : i32
    %c0_i32_1 = arith.constant 0 : i32
    return %c0_i32, %c0_i32_0 : i32, i32
  }
}

</mosaic_0001>

<llo_original>
// kernel: tpu_custom_call.1
$region0: #{tpu_custom_call.1}
  #allocation0 [shape = 'u32[]', space=smem, size = 0x4, offset = 0x4, fixed_abs, tag = 'smem constant byte address 0x4 - core index']
  #allocation1 [shape = 'u32[72,128]{1,0:T(1,128)}', space=vmem, size = 0x9000, scoped, tag = 'internal scratch']
  #allocation2 [shape = 'f32[8,1]{1,0:T(8,128)}', space=vmem, size = 0x1000, scoped, tag = 'scratch operand']
  #allocation3 [shape = 'f32[8,1]{1,0:T(8,128)}', space=vmem, size = 0x1000, scoped, tag = 'scratch operand']
  #allocation4 [shape = 'f32[8,1]{1,0:T(8,128)}', space=vmem, size = 0x1000, scoped, tag = 'scratch operand']
  #allocation5 [shape = 'f32[1,1]{1,0:T(1,128)}', space=vmem, size = 0x200, scoped, tag = 'scratch operand']
  #allocation6 [shape = 'f32[16,32]{1,0:T(8,128)}', space=vmem, size = 0x2000, scoped, tag = 'scratch operand']
  %s0 = inlined_call_operand.vmem [shape: f32[8,32], index: 0, kind: input, shape index: {}]
  %s1 = inlined_call_operand.hbm [shape: f32[8,32], index: 1, kind: input, shape index: {}]
  %s2 = inlined_call_operand.vmem [shape: s32[8,1], index: 2, kind: input, shape index: {}]
  %s3 = inlined_call_operand.hbm [shape: f32[8,512], index: 3, kind: input, shape index: {}]
  %s4 = inlined_call_operand.hbm [shape: f32[1,128], index: 4, kind: output, shape index: {}]
  %s5 = sld [smem:[#allocation0]]
  $region65: #{tpu_custom_call.1} parent=0
    _
  %s7 = ssub.s32 1, %s5
  %s8 = scalar_select 0, %s7, %s5
  $region1: #{tpu_custom_call.1} parent=0
    #allocation7 [shape = 'u8[4096]{0}', space=vmem, size = 0x1000, scoped, tag = 'input window, operand 1, single buffered']
    #allocation8 [shape = 's32[2]{0}', space=sflag, size = 0x8, scoped, tag = 'scoped memory for tpu_custom_call.1']
    #allocation9 [shape = 's32[2]{0}', space=sflag, size = 0x8, scoped, tag = 'scoped memory for tpu_custom_call.1']
    #allocation10 [shape = 'u8[8192]{0}', space=vmem, size = 0x2000, scoped, tag = 'input window, operand 3']
    #allocation11 [shape = 's32[2]{0}', space=sflag, size = 0x8, scoped, tag = 'scoped memory for tpu_custom_call.1']
    #allocation12 [shape = 'u8[512]{0}', space=vmem, size = 0x400, scoped, tag = 'output window, operand 0, single buffered']
    %9 = vsyncpa [#allocation8], 0
    %10 = vsyncpa [#allocation11], 0
    %s11 = scalar_lea.sflag [#allocation11], 1
    %12 = vsyncpa %s11, 0
    %13 = vsyncpa [#allocation9], 0
    loop: start=0, step=1, limit=6
    $region2: #{tpu_custom_call.1} parent=1 // loop_pre_header
      _
    $region3: #{tpu_custom_call.1} parent=1 // loop_header
      %s15 = sphi 0, %s19
      %p16 = scmp.ge.s32.totalorder %s15, 6
      %s23 = sphi 0, %s23
      %s25 = sphi 0, %s23
      %s26 = sphi 0, %s25
      %s40 = sphi 0, %s26
      %s44 = sphi 0, %s44
      %s46 = sphi 0, %s44
      %s47 = sphi 0, %s46
      %s61 = sphi 0, %s47
      %s65 = sphi 0, %s65
      %s67 = sphi 0, %s65
      %s68 = sphi 0, %s67
      %s82 = sphi 0, %s68
      %s88 = sphi 0, %s90
      %s91 = sphi 0, %s88
      %s92 = sphi 0, %s91
      %s108 = sphi 0, %s92
      %s112 = sphi 0, %s112
      %s114 = sphi 0, %s112
      %s115 = sphi 0, %s114
      %s129 = sphi 0, %s115
    $region4: #{tpu_custom_call.1} parent=1 // loop_header_branch
      %18 = sbr.rel (%p16) target = $region8
    $region5: #{tpu_custom_call.1} parent=1 // loop_body
      %s20 = ssub.s32 %s15, 1
      %s21 = ssub.s32 %s15, 2
      %s22 = sadd.s32 %s15, 1
      %s24 = sadd.s32 %s23, 1
      %p27 = scmp.eq.s32.totalorder %s15, 3
      %p28 = scmp.ne.s32.totalorder %s23, %s25
      %p29 = scmp.eq.s32.totalorder %s15, 0
      %p30 = por %p28, %p29
      %p31 = scmp.ne.s32.totalorder %s23, %s25
      %p32 = scmp.eq.s32.totalorder %s20, 3
      %p33 = por %p31, %p32
      %p34 = scmp.ne.s32.totalorder %s25, %s26
      %p35 = scmp.eq.s32.totalorder %s20, 0
      %p36 = por %p34, %p35
      %p37 = scmp.ne.s32.totalorder %s25, %s26
      %p38 = scmp.eq.s32.totalorder %s21, 3
      %p39 = por %p37, %p38
      %p41 = scmp.ne.s32.totalorder %s26, %s40
      %p42 = scmp.eq.s32.totalorder %s21, 0
      %p43 = por %p41, %p42
      %s45 = sadd.s32 %s44, 1
      %p48 = scmp.eq.s32.totalorder %s15, 3
      %p49 = scmp.ne.s32.totalorder %s44, %s46
      %p50 = scmp.eq.s32.totalorder %s15, 0
      %p51 = por %p49, %p50
      %p52 = scmp.ne.s32.totalorder %s44, %s46
      %p53 = scmp.eq.s32.totalorder %s20, 3
      %p54 = por %p52, %p53
      %p55 = scmp.ne.s32.totalorder %s46, %s47
      %p56 = scmp.eq.s32.totalorder %s20, 0
      %p57 = por %p55, %p56
      %p58 = scmp.ne.s32.totalorder %s46, %s47
      %p59 = scmp.eq.s32.totalorder %s21, 3
      %p60 = por %p58, %p59
      %p62 = scmp.ne.s32.totalorder %s47, %s61
      %p63 = scmp.eq.s32.totalorder %s21, 0
      %p64 = por %p62, %p63
      %s66 = sadd.s32 %s65, 1
      %p69 = scmp.eq.s32.totalorder %s15, 3
      %p70 = scmp.ne.s32.totalorder %s65, %s67
      %p71 = scmp.eq.s32.totalorder %s15, 0
      %p72 = por %p70, %p71
      %p73 = scmp.ne.s32.totalorder %s65, %s67
      %p74 = scmp.eq.s32.totalorder %s20, 3
      %p75 = por %p73, %p74
      %p76 = scmp.ne.s32.totalorder %s67, %s68
      %p77 = scmp.eq.s32.totalorder %s20, 0
      %p78 = por %p76, %p77
      %p79 = scmp.ne.s32.totalorder %s67, %s68
      %p80 = scmp.eq.s32.totalorder %s21, 3
      %p81 = por %p79, %p80
      %p83 = scmp.ne.s32.totalorder %s68, %s82
      %p84 = scmp.eq.s32.totalorder %s21, 0
      %p85 = por %p83, %p84
      %s86 = ssub.s32 %s15, %s22
      %p87 = scmp.eq.s32.totalorder %s86, 0
      %s89 = sadd.s32 %s88, 1
      %s90 = scalar_select %p87, %s88, %s89
      %p93 = pneg %p87
      %p94 = scmp.eq.s32.totalorder %s15, 3
      %p95 = por %p93, %p94
      %p96 = scmp.ne.s32.totalorder %s88, %s91
      %p97 = scmp.eq.s32.totalorder %s15, 0
      %p98 = por %p96, %p97
      %p99 = scmp.ne.s32.totalorder %s88, %s91
      %p100 = scmp.eq.s32.totalorder %s20, 3
      %p101 = por %p99, %p100
      %p102 = scmp.ne.s32.totalorder %s91, %s92
      %p103 = scmp.eq.s32.totalorder %s20, 0
      %p104 = por %p102, %p103
      %p105 = scmp.ne.s32.totalorder %s91, %s92
      %p106 = scmp.eq.s32.totalorder %s21, 3
      %p107 = por %p105, %p106
      %p109 = scmp.ne.s32.totalorder %s92, %s108
      %p110 = scmp.eq.s32.totalorder %s21, 0
      %p111 = por %p109, %p110
      %s113 = sadd.s32 %s112, 1
      %p116 = scmp.eq.s32.totalorder %s15, 3
      %p117 = scmp.ne.s32.totalorder %s112, %s114
      %p118 = scmp.eq.s32.totalorder %s15, 0
      %p119 = por %p117, %p118
      %p120 = scmp.ne.s32.totalorder %s112, %s114
      %p121 = scmp.eq.s32.totalorder %s20, 3
      %p122 = por %p120, %p121
      %p123 = scmp.ne.s32.totalorder %s114, %s115
      %p124 = scmp.eq.s32.totalorder %s20, 0
      %p125 = por %p123, %p124
      %p126 = scmp.ne.s32.totalorder %s114, %s115
      %p127 = scmp.eq.s32.totalorder %s21, 3
      %p128 = por %p126, %p127
      %p130 = scmp.ne.s32.totalorder %s115, %s129
      %p131 = scmp.eq.s32.totalorder %s21, 0
      %p132 = por %p130, %p131
      %p133 = scmp.le.s32.totalorder 1, %s15
      %p134 = scmp.lt.s32.totalorder %s15, 5
      %p135 = pnand %p133, %p134
      %p136 = pneg %p135
      // Predicated region
      $region9: #{tpu_custom_call.1} parent=5 // pred_check
        _
      $region10: #{tpu_custom_call.1} parent=5 // pred_check_branch
        %138 = sbr.rel (%p135) target = $region12
      $region11: #{tpu_custom_call.1} parent=5 // pred_region
        %s139 = ssub.s32 %s15, 1
        // Predicated region
        $region13: #{tpu_custom_call.1} parent=11 // pred_check
          %p140 = pneg %p36
        $region14: #{tpu_custom_call.1} parent=11 // pred_check_branch
          %142 = sbr.rel (%p140) target = $region16
        $region15: #{tpu_custom_call.1} parent=11 // pred_region
          _
        $region16: #{tpu_custom_call.1} parent=11 // pred_fallthru
          _
        // Predicated region
        $region17: #{tpu_custom_call.1} parent=11 // pred_check
          %p143 = pneg %p57
        $region18: #{tpu_custom_call.1} parent=11 // pred_check_branch
          %145 = sbr.rel (%p143) target = $region20
        $region19: #{tpu_custom_call.1} parent=11 // pred_region
          %147 = vsyncadd [#allocation8], 0
          %s149 = sshll.u32 %s1, 4
          %s150 = int_to_ptr.hbm [resolvable:$true] %s149
          %s151 = sshll.u32 [#allocation7], 4
          %s152 = int_to_ptr.vmem [resolvable:$true] %s151
          %154 = dma.hbm_to_vmem [thread:$0]  %s150, 128, %s152, [#allocation8]
        $region20: #{tpu_custom_call.1} parent=11 // pred_fallthru
          _
        // Predicated region
        $region21: #{tpu_custom_call.1} parent=11 // pred_check
          %p155 = pneg %p78
        $region22: #{tpu_custom_call.1} parent=11 // pred_check_branch
          %157 = sbr.rel (%p155) target = $region24
        $region23: #{tpu_custom_call.1} parent=11 // pred_region
          _
        $region24: #{tpu_custom_call.1} parent=11 // pred_fallthru
          _
      $region12: #{tpu_custom_call.1} parent=5 // pred_fallthru
        _
      %p158 = scmp.lt.s32.totalorder %s15, 4
      // Predicated region
      $region25: #{tpu_custom_call.1} parent=5 // pred_check
        %p159 = pneg %p158
      $region26: #{tpu_custom_call.1} parent=5 // pred_check_branch
        %161 = sbr.rel (%p159) target = $region28
      $region27: #{tpu_custom_call.1} parent=5 // pred_region
        // Predicated region
        $region29: #{tpu_custom_call.1} parent=27 // pred_check
          %p162 = pneg %p98
        $region30: #{tpu_custom_call.1} parent=27 // pred_check_branch
          %164 = sbr.rel (%p162) target = $region32
        $region31: #{tpu_custom_call.1} parent=27 // pred_region
          %s165 = sand.u32 %s88, 1
          %s166 = scalar_lea.sflag [#allocation11], %s165
          %s167 = sand.u32 %s88, 1
          %s168 = smul.addr %s167, 8
          %s169 = scalar_lea.vmem [#allocation10], %s168
          %171 = vsyncadd %s166, 0
          %s172 = smul.addr %s15, 8
          %s173 = scalar_lea.hbm %s3, %s172
          %s175 = sshll.u32 %s173, 4
          %s176 = int_to_ptr.hbm [resolvable:$true] %s175
          %s177 = sshll.u32 %s169, 4
          %s178 = int_to_ptr.vmem [resolvable:$true] %s177
          %180 = dma.hbm_to_vmem [thread:$0]  %s176, 128, %s178, %s166
        $region32: #{tpu_custom_call.1} parent=27 // pred_fallthru
          _
      $region28: #{tpu_custom_call.1} parent=5 // pred_fallthru
        _
      %p181 = scmp.le.s32.totalorder 1, %s15
      %p182 = scmp.lt.s32.totalorder %s15, 5
      %p183 = pnand %p181, %p182
      %p184 = pneg %p183
      // Predicated region
      $region33: #{tpu_custom_call.1} parent=5 // pred_check
        _
      $region34: #{tpu_custom_call.1} parent=5 // pred_check_branch
        %186 = sbr.rel (%p183) target = $region36
      $region35: #{tpu_custom_call.1} parent=5 // pred_region
        %s187 = ssub.s32 %s15, 1
        // Predicated region
        $region37: #{tpu_custom_call.1} parent=35 // pred_check
          %p188 = pneg %p57
        $region38: #{tpu_custom_call.1} parent=35 // pred_check_branch
          %190 = sbr.rel (%p188) target = $region40
        $region39: #{tpu_custom_call.1} parent=35 // pred_region
          %192 = dma.done [#allocation8], 128
        $region40: #{tpu_custom_call.1} parent=35 // pred_fallthru
          _
        %s193 = sand.u32 %s91, 1
        %s194 = scalar_lea.sflag [#allocation11], %s193
        %s195 = sand.u32 %s91, 1
        %s196 = smul.addr %s195, 8
        %s197 = scalar_lea.vmem [#allocation10], %s196
        // Predicated region
        $region41: #{tpu_custom_call.1} parent=35 // pred_check
          %p198 = pneg %p104
        $region42: #{tpu_custom_call.1} parent=35 // pred_check_branch
          %200 = sbr.rel (%p198) target = $region44
        $region43: #{tpu_custom_call.1} parent=35 // pred_region
          %202 = dma.done %s194, 128
        $region44: #{tpu_custom_call.1} parent=35 // pred_fallthru
          _
        %p203 = pneg %p36
        %p204 = pneg %p33
        %p205 = pneg %p57
        %p206 = pneg %p54
        %p207 = pneg %p78
        %p208 = pneg %p75
        %s209 = sand.u32 %s91, 1
        %s210 = scalar_lea.sflag [#allocation11], %s209
        %s211 = sand.u32 %s91, 1
        %s212 = smul.addr %s211, 8
        %s213 = scalar_lea.vmem [#allocation10], %s212
        %p214 = pneg %p104
        %p215 = pneg %p101
        %p216 = pneg %p125
        %p217 = pneg %p122
        %p218 = scmp.eq.s32.totalorder %s20, 0
        // Predicated region
        $region45: #{tpu_custom_call.1} parent=35 // pred_check
          %p219 = pneg %p218
        $region46: #{tpu_custom_call.1} parent=35 // pred_check_branch
          %221 = sbr.rel (%p219) target = $region48
        $region47: #{tpu_custom_call.1} parent=35 // pred_region
          %222 = vst [vmem:[#allocation12] sm:$0x1] 0.0
          %vm223 = vcmask 7168
          %224 = vst.msk [vmem:[#allocation2] sm:$0xff] %vm223, -1e+30
          %225 = vst.msk [vmem:[#allocation3] sm:$0xff] %vm223, 0.0
          %226 = vst.msk [vmem:[#allocation4] sm:$0xff] %vm223, 0.0
          %v227 = vld [vmem:[%s0] sm:$0xff]
          %v228 = vld [vmem:[#allocation7] sm:$0xff]
          %v229 = vmul.f32 %v227, %v227
          %vm230 = vcmask 261120
          %v231 = vsel %vm230, %v229, 0.0
          %232 = vadd.xlane.f32.xlu0 %v231
          %v233 = vpop.xlane.xlu0 %232
          %v234 = vmax.f32 %v233, 1e-24
          %v235 = vrsqrt.pop %v234
          %v236 = vmul.f32 %v235, %v234
          %v237 = vmul.f32 %v236, %v235
          %v238 = vmul.f32 0.5, %v237
          %v239 = vsub.f32 1.5, %v238
          %v240 = vmul.f32 %v235, %v239
          %vm241 = vweird.f32 %v234
          %vm242 = vweird.f32 %v235
          %vm243 = vmor %vm241, %vm242
          %v244 = vsel %vm243, %v235, %v240
          %v245 = vmul.f32 %v227, %v244
          %v246 = vmul.f32 %v228, %v228
          %v247 = vsel %vm230, %v246, 0.0
          %248 = vadd.xlane.f32.xlu0 %v247
          %v249 = vpop.xlane.xlu0 %248
          %v250 = vmax.f32 %v249, 1e-24
          %v251 = vrsqrt.pop %v250
          %v252 = vmul.f32 %v251, %v250
          %v253 = vmul.f32 %v252, %v251
          %v254 = vmul.f32 0.5, %v253
          %v255 = vsub.f32 1.5, %v254
          %v256 = vmul.f32 %v251, %v255
          %vm257 = vweird.f32 %v250
          %vm258 = vweird.f32 %v251
          %vm259 = vmor %vm257, %vm258
          %v260 = vsel %vm259, %v251, %v256
          %v261 = vmul.f32 %v228, %v260
          %262 = vst.msk [vmem:[#allocation6] sm:$0xff] %vm230, %v245
          %263 = vst.msk [vmem:[#allocation6 + $0x8] sm:$0xff] %vm230, %v261
          %v264 = vmul.f32 %v245, %v261
          %v265 = vsel %vm230, %v264, 0.0
          %266 = vadd.xlane.f32.xlu0 %v265
          %v267 = vpop.xlane.xlu0 %266
          %v268 = vrot.slane %v267, 4
          %v269 = vadd.f32 %v267, %v268
          %v270 = vrot.slane %v269, 2
          %v271 = vadd.f32 %v269, %v270
          %v272 = vrot.slane %v271, 1
          %v273 = vadd.f32 %v271, %v272
          %s274 = vtos %v273
          %v275 = vstv %s274
          %v276 = vmul.f32 %v275, 28.571428
          %v277 = vld [vmem:[#allocation6] sm:$0xff]
          %v278 = vld [vmem:[#allocation6 + $0x8] sm:$0xff]
          %v280 = vsel %vm230, %v277, 0
          %v283 = vsel %vm230, %v278, 0
          %285 = vmatpush.xpose.msra.mxu0 0.0
          %286 = vmatpush.xpose.msra.mxu0 0.0
          %287 = vmatpush.xpose.msra.mxu0 0.0
          %288 = vmatpush.xpose.msra.mxu0 0.0
          %289 = vmatpush.xpose.msra.mxu0 0.0
          %290 = vmatpush.xpose.msra.mxu0 0.0
          %291 = vmatpush.xpose.msra.mxu0 0.0
          %292 = vmatpush.xpose.msra.mxu0 0.0
          %293 = vmatpush.xpose.msra.mxu0 0.0
          %294 = vmatpush.xpose.msra.mxu0 0.0
          %295 = vmatpush.xpose.msra.mxu0 0.0
          %296 = vmatpush.xpose.msra.mxu0 0.0
          %297 = vmatpush.xpose.msra.mxu0 0.0
          %298 = vmatpush.xpose.msra.mxu0 0.0
          %299 = vmatpush.xpose.msra.mxu0 %v283
          %300 = vmatpush.xpose.msra.mxu0 %v280
          %301 = vmatmul.f32.gmra.mxu0 %v280
          %v302 = vpop.f32.mrf.mxu0
          %v303 = vadd.f32 0.0, %v302
          %304 = vmatmul.f32.gmra.mxu0 %v283
          %v305 = vpop.f32.mrf.mxu0
          %v306 = vadd.f32 0.0, %v305
          %307 = vdwg.mxu0
          %v308 = vmul.f32 %v303, 14.285714
          %v309 = vmul.f32 %v306, 14.285714
          %v310 = vlaneseq
          %v311 = vshrl.u32 %v310, 7
          %v312 = vadd.s32 %v311, 8
          %v313 = vlaneseq
          %v314 = vand.u32 %v313, 127
          %vm315 = vcmp.eq.s32.totalorder %v311, %v314
          %vm316 = vcmp.eq.s32.totalorder %v312, %v314
          %v317 = vsel %vm315, -1e+30, %v308
          %v318 = vsel %vm316, -1e+30, %v309
          %vm319 = vcmask 130048
          %v320 = vsel %vm319, %v317, -inf
          %321 = vmax.xlane.f32.xlu0 %v320
          %v322 = vpop.xlane.xlu0 %321
          %v323 = vsel %vm319, %v318, -inf
          %324 = vmax.xlane.f32.xlu0 %v323
          %v325 = vpop.xlane.xlu0 %324
          %v326 = vsub.f32 %v317, %v322
          %v327 = vsub.f32 %v318, %v325
          %v328 = vmul.f32 %v326, 1.442695
          %v329 = vpow.pop %v328
          %v330 = vmul.f32 %v327, 1.442695
          %v331 = vpow.pop %v330
          %v332 = vsel %vm319, %v329, 0.0
          %333 = vadd.xlane.f32.xlu0 %v332
          %v334 = vpop.xlane.xlu0 %333
          %v335 = vsel %vm319, %v331, 0.0
          %336 = vadd.xlane.f32.xlu0 %v335
          %v337 = vpop.xlane.xlu0 %336
          %v338 = vlog2.pop %v334
          %v339 = vmul.f32 %v338, 0.6931472
          %v340 = vlog2.pop %v337
          %v341 = vmul.f32 %v340, 0.6931472
          %v342 = vadd.f32 %v339, %v322
          %v343 = vadd.f32 %v341, %v325
          %v344 = vsel %vm223, %v342, 0.0
          %v345 = vsel %vm223, %v343, 0.0
          %v346 = vadd.f32 %v344, %v345
          %347 = vadd.xlane.f32.xlu0 %v346
          %v348 = vpop.xlane.xlu0 %347
          %v349 = vrot.slane %v348, 4
          %v350 = vadd.f32 %v348, %v349
          %v351 = vrot.slane %v350, 2
          %v352 = vadd.f32 %v350, %v351
          %v353 = vrot.slane %v352, 1
          %v354 = vadd.f32 %v352, %v353
          %s355 = vtos %v354
          %v356 = vstv %s355
          %v357 = vadd.f32 %v356, 0.0
          %v358 = vsub.f32 %v357, %v276
          %v359 = vmul.f32 %v358, 0.0625
          %vm360 = vcmask 0
          %361 = vst.msk [vmem:[#allocation5] sm:$0x1] %vm360, %v359
        $region48: #{tpu_custom_call.1} parent=35 // pred_fallthru
          _
        %v362 = vld [vmem:[%s197] sm:$0xff]
        %s363 = smul.u32 %s20, 128
        %v364 = vlaneseq
        %v365 = vand.u32 %v364, 127
        %v366 = vstv %s363
        %v367 = vadd.s32 %v366, %v365
        %v368 = vld [vmem:[%s2] sm:$0xff]
        %v369 = vld [vmem:[#allocation2] sm:$0xff]
        %370 = vmax.xlane.f32.xlu0 %v362
        %v371 = vpop.xlane.xlu0 %370
        %v372 = vmax.f32 %v369, %v371
        %v373 = vsub.f32 %v369, %v372
        %v374 = vmul.f32 %v373, 1.442695
        %v375 = vpow.pop %v374
        %v376 = vld [vmem:[#allocation3] sm:$0xff]
        %v377 = vmul.f32 %v375, %v376
        %379 = vset.pattern.permute.xlu0 0
        %380 = vperm.xlu0 %379, %v372
        %v381 = vpop.permute.xlu0 %380
        %v383 = vsub.f32 %v362, %v381
        %v384 = vmul.f32 %v383, 1.442695
        %v385 = vpow.pop %v384
        %386 = vadd.xlane.f32.xlu0 %v385
        %v387 = vpop.xlane.xlu0 %386
        %v388 = vadd.f32 %v377, %v387
        %vm389 = vcmask 7168
        %390 = vst.msk [vmem:[#allocation3] sm:$0xff] %vm389, %v388
        %391 = vst.msk [vmem:[#allocation2] sm:$0xff] %vm389, %v372
        %v392 = vld [vmem:[#allocation4] sm:$0xff]
        %393 = vset.pattern.permute.xlu0 0
        %394 = vperm.xlu0 %393, %v368
        %v395 = vpop.permute.xlu0 %394
        %vm396 = vcmp.eq.s32.totalorder %v367, %v395
        %v397 = vsel %vm396, %v362, 0.0
        %398 = vadd.xlane.f32.xlu0 %v397
        %v399 = vpop.xlane.xlu0 %398
        %v400 = vadd.f32 %v392, %v399
        %401 = vst.msk [vmem:[#allocation4] sm:$0xff] %vm389, %v400
        %p402 = scmp.eq.s32.totalorder %s20, 3
        // Predicated region
        $region49: #{tpu_custom_call.1} parent=35 // pred_check
          %p403 = pneg %p402
        $region50: #{tpu_custom_call.1} parent=35 // pred_check_branch
          %405 = sbr.rel (%p403) target = $region52
        $region51: #{tpu_custom_call.1} parent=35 // pred_region
          %v406 = vld [vmem:[#allocation3] sm:$0xff]
          %v407 = vlog2.pop %v406
          %v408 = vmul.f32 %v407, 0.6931472
          %v409 = vld [vmem:[#allocation2] sm:$0xff]
          %v410 = vadd.f32 %v408, %v409
          %v411 = vld [vmem:[#allocation4] sm:$0xff]
          %v412 = vsub.f32 %v410, %v411
          %v413 = vsel %vm389, %v412, 0.0
          %v414 = vrot.slane %v413, 4
          %v415 = vadd.f32 %v413, %v414
          %v416 = vrot.slane %v415, 2
          %v417 = vadd.f32 %v415, %v416
          %v418 = vrot.slane %v417, 1
          %v419 = vadd.f32 %v417, %v418
          %v420 = vmul.f32 %v419, 0.125
          %v421 = vld [vmem:[#allocation5] sm:$0x1]
          %v422 = vmul.f32 %v421, 0.1
          %v423 = vadd.f32 %v420, %v422
          %vm424 = vcmp.eq.s32.totalorder %v365, 0
          %vm425 = vcmp.eq.s32.totalorder %v365, 1
          %vm426 = vcmp.eq.s32.totalorder %v365, 2
          %428 = vset.pattern.permute.xlu0 0
          %429 = vperm.xlu0 %428, %v421
          %v430 = vpop.permute.xlu0 %429
          %v432 = vperm.slane %v430, 0
          %v433 = vsel %vm426, %v432, 0.0
          %435 = vset.pattern.permute.xlu0 0
          %436 = vperm.xlu0 %435, %v420
          %v437 = vpop.permute.xlu0 %436
          %v439 = vsel %vm425, %v437, %v433
          %441 = vset.pattern.permute.xlu0 0
          %442 = vperm.xlu0 %441, %v423
          %v443 = vpop.permute.xlu0 %442
          %v445 = vsel %vm424, %v443, %v439
          %446 = vst [vmem:[#allocation12] sm:$0x1] %v445
        $region52: #{tpu_custom_call.1} parent=35 // pred_fallthru
          _
        // Predicated region
        $region53: #{tpu_custom_call.1} parent=35 // pred_check
          %p447 = pneg %p122
        $region54: #{tpu_custom_call.1} parent=35 // pred_check_branch
          %449 = sbr.rel (%p447) target = $region56
        $region55: #{tpu_custom_call.1} parent=35 // pred_region
          %451 = vsyncadd [#allocation9], 0
          %s453 = sshll.u32 [#allocation12], 4
          %s454 = int_to_ptr.vmem [resolvable:$true] %s453
          %s455 = sshll.u32 %s4, 4
          %s456 = int_to_ptr.hbm [resolvable:$true] %s455
          %458 = dma.vmem_to_hbm [thread:$0]  %s454, 16, %s456, [#allocation9]
        $region56: #{tpu_custom_call.1} parent=35 // pred_fallthru
          _
        // Predicated region
        $region57: #{tpu_custom_call.1} parent=35 // pred_check
          %p459 = pneg %p122
        $region58: #{tpu_custom_call.1} parent=35 // pred_check_branch
          %461 = sbr.rel (%p459) target = $region60
        $region59: #{tpu_custom_call.1} parent=35 // pred_region
          %463 = dma.done [#allocation9], 16
        $region60: #{tpu_custom_call.1} parent=35 // pred_fallthru
          _
      $region36: #{tpu_custom_call.1} parent=5 // pred_fallthru
        _
      %p464 = scmp.le.s32.totalorder 2, %s15
      // Predicated region
      $region61: #{tpu_custom_call.1} parent=5 // pred_check
        %p465 = pneg %p464
      $region62: #{tpu_custom_call.1} parent=5 // pred_check_branch
        %467 = sbr.rel (%p465) target = $region64
      $region63: #{tpu_custom_call.1} parent=5 // pred_region
        %s468 = ssub.s32 %s15, 2
      $region64: #{tpu_custom_call.1} parent=5 // pred_fallthru
        _
    $region6: #{tpu_custom_call.1} parent=1 // loop_footer
      %s19 = sadd.s32 1, %s15
    $region7: #{tpu_custom_call.1} parent=1 // loop_footer_branch
      %14 = sbr.rel target = $region3
    $region8: #{tpu_custom_call.1} parent=1 // loop_exit
      _
    %469 = vsyncpa [#allocation8], 1
    %s470 = scalar_lea.sflag [#allocation8], 1
    %471 = vsyncpa %s470, 1
    %472 = vsyncpa [#allocation11], 1
    %s473 = scalar_lea.sflag [#allocation11], 1
    %474 = vsyncpa %s473, 1
    %475 = vsyncpa [#allocation9], 1
    %s476 = scalar_lea.sflag [#allocation9], 1
    %477 = vsyncpa %s476, 1

</llo_original>
